<compile_context>
chip_gen: v7x
topology: tpu7x:2x2x1
jax: 0.10.0
libtpu: 0.0.40
codegen_flags: <defaults>
</compile_context>

<pallas_src>
import functools

import jax
import jax.numpy as jnp
from jax.experimental import pallas as pl
from jax.experimental.pallas import tpu as pltpu

IN, HID, OUT = 4, 4, 3
LANES = 128

# Offsets into the packed parameter vector (PyTorch layout: W is [out, in]).
W1_OFF = 0                       # w1.flatten(): 16 values
B1_OFF = W1_OFF + HID * IN       # b1:            4 values
W2_OFF = B1_OFF + HID            # w2.flatten(): 12 values
B2_OFF = W2_OFF + OUT * HID      # b2:            3 values
N_PARAMS = B2_OFF + OUT          # 35 scalars total


def _round_up(n, m):
    return -(-n // m) * m


def mlp_kernel(p_ref, x_ref, o_ref):
    """p_ref: (35,) f32 in SMEM (resident across the grid);
    x_ref: (IN, S, 128) tile; o_ref: (OUT, S, 128) tile."""
    # Dense (S, 128) feature rows: every vreg has all 8 sublanes occupied.
    x_rows = [x_ref[k].astype(jnp.float32) for k in range(IN)]

    # fc1 + ReLU: h_j = relu(sum_k w1[j, k] * x_k + b1[j])  (scalar-broadcast MACs)
    h_rows = []
    for j in range(HID):
        acc = x_rows[0] * p_ref[W1_OFF + j * IN]
        for k in range(1, IN):
            acc = acc + x_rows[k] * p_ref[W1_OFF + j * IN + k]
        acc = acc + p_ref[B1_OFF + j]                 # scalar-broadcast bias add
        h_rows.append(jnp.maximum(acc, 0.0))

    # fc2: y_i = sum_k w2[i, k] * h_k + b2[i]; each row stored directly.
    for i in range(OUT):
        acc = h_rows[0] * p_ref[W2_OFF + i * HID]
        for k in range(1, HID):
            acc = acc + h_rows[k] * p_ref[W2_OFF + i * HID + k]
        acc = acc + p_ref[B2_OFF + i]
        o_ref[i] = acc.astype(o_ref.dtype)


def pack_params(w1, b1, w2, b2):
    """Pack all parameters into one flat f32 vector (single small SMEM operand)."""
    return jnp.concatenate(
        [w1.reshape(-1), b1.reshape(-1), w2.reshape(-1), b2.reshape(-1)]
    ).astype(jnp.float32)


def net_forward_fm(x_fm, params, *, tile_b=65536, out_dtype=jnp.float32):
    """Feature-major entry point (no wrapper transposes / HBM relayout).

    x_fm: (IN, nseg, 128) (batch on the lane axis, 128 per segment);
    returns (OUT, nseg, 128)."""
    feat, nseg, lanes = x_fm.shape
    assert feat == IN and lanes == LANES
    assert params.shape == (N_PARAMS,)

    # Segments (of 128 lanes) per grid step.
    seg_tile = max(1, min(tile_b // LANES, nseg))
    if seg_tile < nseg:
        # Multi-tile: block's sublane dim must be a multiple of 16
        # (covers the (8,128) rule for f32 and (16,128) packing for bf16).
        seg_tile = _round_up(seg_tile, 16)
    seg_tile = min(seg_tile, nseg)        # full-extent block is always legal
    grid = (pl.cdiv(nseg, seg_tile),)     # last block may be partial (masked)

    return pl.pallas_call(
        mlp_kernel,
        out_shape=jax.ShapeDtypeStruct((OUT, nseg, LANES), out_dtype),
        grid=grid,
        in_specs=[
            pl.BlockSpec(memory_space=pltpu.MemorySpace.SMEM),          # params
            pl.BlockSpec((IN, seg_tile, LANES), lambda i: (0, i, 0)),   # x tile
        ],
        out_specs=pl.BlockSpec((OUT, seg_tile, LANES), lambda i: (0, i, 0)),
        compiler_params=pltpu.CompilerParams(
            dimension_semantics=("parallel",),
        ),
    )(params, x_fm)


@functools.partial(jax.jit, static_argnames=("tile_b", "x_dtype"))
def net_forward(x, w1, b1, w2, b2, *, tile_b=65536, x_dtype=jnp.float32):
    """x: (B, 4) f32 -> (B, 3) f32.  Weights in the PyTorch convention:
    w1: (4, 4) [out, in], b1: (4,), w2: (3, 4) [out, in], b2: (3,).

    x_dtype=jnp.bfloat16 streams activations at half width (f32 accumulation
    in-kernel) — recommended for bandwidth-bound deployments on v5e/v6e/v7x."""
    B = x.shape[0]
    Bp = _round_up(B, LANES)              # pad only to the 128-lane boundary
    nseg = Bp // LANES

    params = pack_params(w1, b1, w2, b2)

    # Layout plumbing for the row-major (B, 4) API: transpose to feature-major,
    # pad to the lane boundary, then a *free* contiguous reshape to
    # (IN, nseg, 128).  Callers holding activations feature-major should use
    # net_forward_fm directly and skip this traffic.
    xt = jnp.transpose(x).astype(x_dtype)                 # (4, B)
    if Bp != B:
        xt = jnp.pad(xt, ((0, 0), (0, Bp - B)))
    x_fm = xt.reshape(IN, nseg, LANES)

    out_fm = net_forward_fm(x_fm, params, tile_b=tile_b)  # (3, nseg, 128) f32
    out_t = out_fm.reshape(OUT, Bp)[:, :B]
    return jnp.transpose(out_t)                            # (B, 3)


def init_params(key):
    """PyTorch-style uniform(-1/sqrt(fan_in), 1/sqrt(fan_in)) init,
    shapes follow nn.Linear(4, 4) and nn.Linear(4, 3) ([out, in])."""
    k1, k2, k3, k4 = jax.random.split(key, 4)
    bound = 1.0 / jnp.sqrt(4.0)
    w1 = jax.random.uniform(k1, (HID, IN), jnp.float32, -bound, bound)
    b1 = jax.random.uniform(k2, (HID,), jnp.float32, -bound, bound)
    w2 = jax.random.uniform(k3, (OUT, HID), jnp.float32, -bound, bound)
    b2 = jax.random.uniform(k4, (OUT,), jnp.float32, -bound, bound)
    return w1, b1, w2, b2


def reference_forward(x, w1, b1, w2, b2):
    h = jnp.maximum(x @ w1.T + b1, 0.0)
    return h @ w2.T + b2


if __name__ == "__main__":
    key = jax.random.PRNGKey(0)
    kx1, kx2, kx3, kp = jax.random.split(key, 4)
    w1, b1, w2, b2 = init_params(kp)

    # 1) Small batch: single grid step, block == full array extent.
    x1 = jax.random.normal(kx1, (8, IN), dtype=jnp.float32)
    out1 = jax.block_until_ready(net_forward(x1, w1, b1, w2, b2))
    ref1 = reference_forward(x1, w1, b1, w2, b2)
    assert out1.shape == (8, OUT)
    assert jnp.allclose(out1, ref1, atol=1e-5, rtol=1e-5)

    # 2) Multi-tile grid with a partial (masked) last block:
    #    nseg = 20 segments, 16 segments per tile -> grid of 2 steps.
    x2 = jax.random.normal(kx2, (2560, IN), dtype=jnp.float32)
    out2 = jax.block_until_ready(net_forward(x2, w1, b1, w2, b2, tile_b=2048))
    ref2 = reference_forward(x2, w1, b1, w2, b2)
    assert out2.shape == (2560, OUT)
    assert jnp.allclose(out2, ref2, atol=1e-5, rtol=1e-5)

    # 3) bf16-streamed activations (f32 accumulation in-kernel), looser tolerance.
    x3 = jax.random.normal(kx3, (300, IN), dtype=jnp.float32)
    out3 = jax.block_until_ready(
        net_forward(x3, w1, b1, w2, b2, x_dtype=jnp.bfloat16))
    ref3 = reference_forward(x3, w1, b1, w2, b2)
    assert out3.shape == (300, OUT)
    assert jnp.allclose(out3, ref3, atol=3e-2, rtol=3e-2)

    print("KERNEL_OK")
</pallas_src>

<mosaic_0001>
module attributes {stable_mosaic.version = 11 : i64} {
  func.func @mlp_kernel(%arg0: i32, %arg1: memref<35xf32, #tpu.memory_space<smem>>, %arg2: memref<4x1x128xf32, #tpu.memory_space<vmem>>, %arg3: memref<3x1x128xf32, #tpu.memory_space<vmem>>) attributes {dimension_semantics = [#tpu.dimension_semantics<parallel>], iteration_bounds = array<i64: 1>, scalar_prefetch = 0 : i64, scratch_operands = 0 : i64, tpu.core_type = #tpu.core_type<tc>, window_params = [{transform_indices = @transform_0, window_bounds = array<i64: 35>}, {transform_indices = @transform_1, window_bounds = array<i64: 4, 1, 128>}, {transform_indices = @transform_2, window_bounds = array<i64: 3, 1, 128>}]} {
    %c0 = arith.constant 0 : index
    %c0_0 = arith.constant 0 : index
    %c0_1 = arith.constant 0 : index
    %0 = vector.load %arg2[%c0, %c0_0, %c0_1] : memref<4x1x128xf32, #tpu.memory_space<vmem>>, vector<1x1x128xf32>
    %1 = vector.shape_cast %0 : vector<1x1x128xf32> to vector<1x128xf32>
    %c1 = arith.constant 1 : index
    %c0_2 = arith.constant 0 : index
    %c0_3 = arith.constant 0 : index
    %2 = vector.load %arg2[%c1, %c0_2, %c0_3] : memref<4x1x128xf32, #tpu.memory_space<vmem>>, vector<1x1x128xf32>
    %3 = vector.shape_cast %2 : vector<1x1x128xf32> to vector<1x128xf32>
    %c2 = arith.constant 2 : index
    %c0_4 = arith.constant 0 : index
    %c0_5 = arith.constant 0 : index
    %4 = vector.load %arg2[%c2, %c0_4, %c0_5] : memref<4x1x128xf32, #tpu.memory_space<vmem>>, vector<1x1x128xf32>
    %5 = vector.shape_cast %4 : vector<1x1x128xf32> to vector<1x128xf32>
    %c3 = arith.constant 3 : index
    %c0_6 = arith.constant 0 : index
    %c0_7 = arith.constant 0 : index
    %6 = vector.load %arg2[%c3, %c0_6, %c0_7] : memref<4x1x128xf32, #tpu.memory_space<vmem>>, vector<1x1x128xf32>
    %7 = vector.shape_cast %6 : vector<1x1x128xf32> to vector<1x128xf32>
    %c0_8 = arith.constant 0 : index
    %8 = memref.load %arg1[%c0_8] : memref<35xf32, #tpu.memory_space<smem>>
    %9 = vector.broadcast %8 : f32 to vector<1x128xf32>
    %10 = arith.mulf %1, %9 : vector<1x128xf32>
    %c1_9 = arith.constant 1 : index
    %11 = memref.load %arg1[%c1_9] : memref<35xf32, #tpu.memory_space<smem>>
    %12 = vector.broadcast %11 : f32 to vector<1x128xf32>
    %13 = arith.mulf %3, %12 : vector<1x128xf32>
    %14 = arith.addf %10, %13 : vector<1x128xf32>
    %c2_10 = arith.constant 2 : index
    %15 = memref.load %arg1[%c2_10] : memref<35xf32, #tpu.memory_space<smem>>
    %16 = vector.broadcast %15 : f32 to vector<1x128xf32>
    %17 = arith.mulf %5, %16 : vector<1x128xf32>
    %18 = arith.addf %14, %17 : vector<1x128xf32>
    %c3_11 = arith.constant 3 : index
    %19 = memref.load %arg1[%c3_11] : memref<35xf32, #tpu.memory_space<smem>>
    %20 = vector.broadcast %19 : f32 to vector<1x128xf32>
    %21 = arith.mulf %7, %20 : vector<1x128xf32>
    %22 = arith.addf %18, %21 : vector<1x128xf32>
    %c16 = arith.constant 16 : index
    %23 = memref.load %arg1[%c16] : memref<35xf32, #tpu.memory_space<smem>>
    %24 = vector.broadcast %23 : f32 to vector<1x128xf32>
    %25 = arith.addf %22, %24 : vector<1x128xf32>
    %cst = arith.constant 0.000000e+00 : f32
    %26 = vector.broadcast %cst : f32 to vector<1x128xf32>
    %27 = arith.maximumf %25, %26 : vector<1x128xf32>
    %c4 = arith.constant 4 : index
    %28 = memref.load %arg1[%c4] : memref<35xf32, #tpu.memory_space<smem>>
    %29 = vector.broadcast %28 : f32 to vector<1x128xf32>
    %30 = arith.mulf %1, %29 : vector<1x128xf32>
    %c5 = arith.constant 5 : index
    %31 = memref.load %arg1[%c5] : memref<35xf32, #tpu.memory_space<smem>>
    %32 = vector.broadcast %31 : f32 to vector<1x128xf32>
    %33 = arith.mulf %3, %32 : vector<1x128xf32>
    %34 = arith.addf %30, %33 : vector<1x128xf32>
    %c6 = arith.constant 6 : index
    %35 = memref.load %arg1[%c6] : memref<35xf32, #tpu.memory_space<smem>>
    %36 = vector.broadcast %35 : f32 to vector<1x128xf32>
    %37 = arith.mulf %5, %36 : vector<1x128xf32>
    %38 = arith.addf %34, %37 : vector<1x128xf32>
    %c7 = arith.constant 7 : index
    %39 = memref.load %arg1[%c7] : memref<35xf32, #tpu.memory_space<smem>>
    %40 = vector.broadcast %39 : f32 to vector<1x128xf32>
    %41 = arith.mulf %7, %40 : vector<1x128xf32>
    %42 = arith.addf %38, %41 : vector<1x128xf32>
    %c17 = arith.constant 17 : index
    %43 = memref.load %arg1[%c17] : memref<35xf32, #tpu.memory_space<smem>>
    %44 = vector.broadcast %43 : f32 to vector<1x128xf32>
    %45 = arith.addf %42, %44 : vector<1x128xf32>
    %cst_12 = arith.constant 0.000000e+00 : f32
    %46 = vector.broadcast %cst_12 : f32 to vector<1x128xf32>
    %47 = arith.maximumf %45, %46 : vector<1x128xf32>
    %c8 = arith.constant 8 : index
    %48 = memref.load %arg1[%c8] : memref<35xf32, #tpu.memory_space<smem>>
    %49 = vector.broadcast %48 : f32 to vector<1x128xf32>
    %50 = arith.mulf %1, %49 : vector<1x128xf32>
    %c9 = arith.constant 9 : index
    %51 = memref.load %arg1[%c9] : memref<35xf32, #tpu.memory_space<smem>>
    %52 = vector.broadcast %51 : f32 to vector<1x128xf32>
    %53 = arith.mulf %3, %52 : vector<1x128xf32>
    %54 = arith.addf %50, %53 : vector<1x128xf32>
    %c10 = arith.constant 10 : index
    %55 = memref.load %arg1[%c10] : memref<35xf32, #tpu.memory_space<smem>>
    %56 = vector.broadcast %55 : f32 to vector<1x128xf32>
    %57 = arith.mulf %5, %56 : vector<1x128xf32>
    %58 = arith.addf %54, %57 : vector<1x128xf32>
    %c11 = arith.constant 11 : index
    %59 = memref.load %arg1[%c11] : memref<35xf32, #tpu.memory_space<smem>>
    %60 = vector.broadcast %59 : f32 to vector<1x128xf32>
    %61 = arith.mulf %7, %60 : vector<1x128xf32>
    %62 = arith.addf %58, %61 : vector<1x128xf32>
    %c18 = arith.constant 18 : index
    %63 = memref.load %arg1[%c18] : memref<35xf32, #tpu.memory_space<smem>>
    %64 = vector.broadcast %63 : f32 to vector<1x128xf32>
    %65 = arith.addf %62, %64 : vector<1x128xf32>
    %cst_13 = arith.constant 0.000000e+00 : f32
    %66 = vector.broadcast %cst_13 : f32 to vector<1x128xf32>
    %67 = arith.maximumf %65, %66 : vector<1x128xf32>
    %c12 = arith.constant 12 : index
    %68 = memref.load %arg1[%c12] : memref<35xf32, #tpu.memory_space<smem>>
    %69 = vector.broadcast %68 : f32 to vector<1x128xf32>
    %70 = arith.mulf %1, %69 : vector<1x128xf32>
    %c13 = arith.constant 13 : index
    %71 = memref.load %arg1[%c13] : memref<35xf32, #tpu.memory_space<smem>>
    %72 = vector.broadcast %71 : f32 to vector<1x128xf32>
    %73 = arith.mulf %3, %72 : vector<1x128xf32>
    %74 = arith.addf %70, %73 : vector<1x128xf32>
    %c14 = arith.constant 14 : index
    %75 = memref.load %arg1[%c14] : memref<35xf32, #tpu.memory_space<smem>>
    %76 = vector.broadcast %75 : f32 to vector<1x128xf32>
    %77 = arith.mulf %5, %76 : vector<1x128xf32>
    %78 = arith.addf %74, %77 : vector<1x128xf32>
    %c15 = arith.constant 15 : index
    %79 = memref.load %arg1[%c15] : memref<35xf32, #tpu.memory_space<smem>>
    %80 = vector.broadcast %79 : f32 to vector<1x128xf32>
    %81 = arith.mulf %7, %80 : vector<1x128xf32>
    %82 = arith.addf %78, %81 : vector<1x128xf32>
    %c19 = arith.constant 19 : index
    %83 = memref.load %arg1[%c19] : memref<35xf32, #tpu.memory_space<smem>>
    %84 = vector.broadcast %83 : f32 to vector<1x128xf32>
    %85 = arith.addf %82, %84 : vector<1x128xf32>
    %cst_14 = arith.constant 0.000000e+00 : f32
    %86 = vector.broadcast %cst_14 : f32 to vector<1x128xf32>
    %87 = arith.maximumf %85, %86 : vector<1x128xf32>
    %c20 = arith.constant 20 : index
    %88 = memref.load %arg1[%c20] : memref<35xf32, #tpu.memory_space<smem>>
    %89 = vector.broadcast %88 : f32 to vector<1x128xf32>
    %90 = arith.mulf %27, %89 : vector<1x128xf32>
    %c21 = arith.constant 21 : index
    %91 = memref.load %arg1[%c21] : memref<35xf32, #tpu.memory_space<smem>>
    %92 = vector.broadcast %91 : f32 to vector<1x128xf32>
    %93 = arith.mulf %47, %92 : vector<1x128xf32>
    %94 = arith.addf %90, %93 : vector<1x128xf32>
    %c22 = arith.constant 22 : index
    %95 = memref.load %arg1[%c22] : memref<35xf32, #tpu.memory_space<smem>>
    %96 = vector.broadcast %95 : f32 to vector<1x128xf32>
    %97 = arith.mulf %67, %96 : vector<1x128xf32>
    %98 = arith.addf %94, %97 : vector<1x128xf32>
    %c23 = arith.constant 23 : index
    %99 = memref.load %arg1[%c23] : memref<35xf32, #tpu.memory_space<smem>>
    %100 = vector.broadcast %99 : f32 to vector<1x128xf32>
    %101 = arith.mulf %87, %100 : vector<1x128xf32>
    %102 = arith.addf %98, %101 : vector<1x128xf32>
    %c32 = arith.constant 32 : index
    %103 = memref.load %arg1[%c32] : memref<35xf32, #tpu.memory_space<smem>>
    %104 = vector.broadcast %103 : f32 to vector<1x128xf32>
    %105 = arith.addf %102, %104 : vector<1x128xf32>
    %c0_15 = arith.constant 0 : index
    %c0_16 = arith.constant 0 : index
    %c0_17 = arith.constant 0 : index
    %106 = vector.load %arg3[%c0_15, %c0_16, %c0_17] : memref<3x1x128xf32, #tpu.memory_space<vmem>>, vector<1x1x128xf32>
    %107 = vector.shape_cast %106 : vector<1x1x128xf32> to vector<1x128xf32>
    %108 = vector.shape_cast %105 : vector<1x128xf32> to vector<1x1x128xf32>
    tpu.vector_store %arg3[%c0_15, %c0_16, %c0_17], %108 {strides = array<i32>} : memref<3x1x128xf32, #tpu.memory_space<vmem>>, vector<1x1x128xf32>,
    %c24 = arith.constant 24 : index
    %109 = memref.load %arg1[%c24] : memref<35xf32, #tpu.memory_space<smem>>
    %110 = vector.broadcast %109 : f32 to vector<1x128xf32>
    %111 = arith.mulf %27, %110 : vector<1x128xf32>
    %c25 = arith.constant 25 : index
    %112 = memref.load %arg1[%c25] : memref<35xf32, #tpu.memory_space<smem>>
    %113 = vector.broadcast %112 : f32 to vector<1x128xf32>
    %114 = arith.mulf %47, %113 : vector<1x128xf32>
    %115 = arith.addf %111, %114 : vector<1x128xf32>
    %c26 = arith.constant 26 : index
    %116 = memref.load %arg1[%c26] : memref<35xf32, #tpu.memory_space<smem>>
    %117 = vector.broadcast %116 : f32 to vector<1x128xf32>
    %118 = arith.mulf %67, %117 : vector<1x128xf32>
    %119 = arith.addf %115, %118 : vector<1x128xf32>
    %c27 = arith.constant 27 : index
    %120 = memref.load %arg1[%c27] : memref<35xf32, #tpu.memory_space<smem>>
    %121 = vector.broadcast %120 : f32 to vector<1x128xf32>
    %122 = arith.mulf %87, %121 : vector<1x128xf32>
    %123 = arith.addf %119, %122 : vector<1x128xf32>
    %c33 = arith.constant 33 : index
    %124 = memref.load %arg1[%c33] : memref<35xf32, #tpu.memory_space<smem>>
    %125 = vector.broadcast %124 : f32 to vector<1x128xf32>
    %126 = arith.addf %123, %125 : vector<1x128xf32>
    %c1_18 = arith.constant 1 : index
    %c0_19 = arith.constant 0 : index
    %c0_20 = arith.constant 0 : index
    %127 = vector.load %arg3[%c1_18, %c0_19, %c0_20] : memref<3x1x128xf32, #tpu.memory_space<vmem>>, vector<1x1x128xf32>
    %128 = vector.shape_cast %127 : vector<1x1x128xf32> to vector<1x128xf32>
    %129 = vector.shape_cast %126 : vector<1x128xf32> to vector<1x1x128xf32>
    tpu.vector_store %arg3[%c1_18, %c0_19, %c0_20], %129 {strides = array<i32>} : memref<3x1x128xf32, #tpu.memory_space<vmem>>, vector<1x1x128xf32>,
    %c28 = arith.constant 28 : index
    %130 = memref.load %arg1[%c28] : memref<35xf32, #tpu.memory_space<smem>>
    %131 = vector.broadcast %130 : f32 to vector<1x128xf32>
    %132 = arith.mulf %27, %131 : vector<1x128xf32>
    %c29 = arith.constant 29 : index
    %133 = memref.load %arg1[%c29] : memref<35xf32, #tpu.memory_space<smem>>
    %134 = vector.broadcast %133 : f32 to vector<1x128xf32>
    %135 = arith.mulf %47, %134 : vector<1x128xf32>
    %136 = arith.addf %132, %135 : vector<1x128xf32>
    %c30 = arith.constant 30 : index
    %137 = memref.load %arg1[%c30] : memref<35xf32, #tpu.memory_space<smem>>
    %138 = vector.broadcast %137 : f32 to vector<1x128xf32>
    %139 = arith.mulf %67, %138 : vector<1x128xf32>
    %140 = arith.addf %136, %139 : vector<1x128xf32>
    %c31 = arith.constant 31 : index
    %141 = memref.load %arg1[%c31] : memref<35xf32, #tpu.memory_space<smem>>
    %142 = vector.broadcast %141 : f32 to vector<1x128xf32>
    %143 = arith.mulf %87, %142 : vector<1x128xf32>
    %144 = arith.addf %140, %143 : vector<1x128xf32>
    %c34 = arith.constant 34 : index
    %145 = memref.load %arg1[%c34] : memref<35xf32, #tpu.memory_space<smem>>
    %146 = vector.broadcast %145 : f32 to vector<1x128xf32>
    %147 = arith.addf %144, %146 : vector<1x128xf32>
    %c2_21 = arith.constant 2 : index
    %c0_22 = arith.constant 0 : index
    %c0_23 = arith.constant 0 : index
    %148 = vector.load %arg3[%c2_21, %c0_22, %c0_23] : memref<3x1x128xf32, #tpu.memory_space<vmem>>, vector<1x1x128xf32>
    %149 = vector.shape_cast %148 : vector<1x1x128xf32> to vector<1x128xf32>
    %150 = vector.shape_cast %147 : vector<1x128xf32> to vector<1x1x128xf32>
    tpu.vector_store %arg3[%c2_21, %c0_22, %c0_23], %150 {strides = array<i32>} : memref<3x1x128xf32, #tpu.memory_space<vmem>>, vector<1x1x128xf32>,
    return
  }
  func.func @transform_0(%arg0: i32) -> i32 {
    %c0_i32 = arith.constant 0 : i32
    %c0_i32_0 = arith.constant 0 : i32
    return %c0_i32 : i32
  }
  func.func @transform_1(%arg0: i32) -> (i32, i32, i32) {
    %c0_i32 = arith.constant 0 : i32
    %c0_i32_0 = arith.constant 0 : i32
    %c0_i32_1 = arith.constant 0 : i32
    return %c0_i32, %arg0, %c0_i32_0 : i32, i32, i32
  }
  func.func @transform_2(%arg0: i32) -> (i32, i32, i32) {
    %c0_i32 = arith.constant 0 : i32
    %c0_i32_0 = arith.constant 0 : i32
    %c0_i32_1 = arith.constant 0 : i32
    return %c0_i32, %arg0, %c0_i32_0 : i32, i32, i32
  }
}

</mosaic_0001>

<llo_original>
// kernel: net_forward.1
$region0: #{net_forward.1}
  #allocation0 [shape = 'u32[]', space=smem, size = 0x4, offset = 0x4, fixed_abs, tag = 'smem constant byte address 0x4 - core index']
  #allocation1 [shape = 'u32[144,128]{1,0:T(1,128)}', space=vmem, size = 0x12000, scoped, tag = 'internal scratch']
  %s0 = inlined_call_operand.vmem [shape: f32[35], index: 0, kind: input, shape index: {}]
  %s1 = inlined_call_operand.vmem [shape: f32[4,1,128], index: 1, kind: input, shape index: {}]
  %s2 = inlined_call_operand.vmem [shape: f32[3,1,128], index: 2, kind: output, shape index: {}]
  %s3 = sld [smem:[#allocation0]]
  $region22: #{net_forward.1} parent=0
    _
  %s5 = ssub.s32 1, %s3
  %s6 = scalar_select 0, %s5, %s3
  $region1: #{net_forward.1} parent=0
    #allocation2 [shape = 'u8[512]{0}', space=smem, size = 0x200, scoped, tag = 'input window, operand 0, single buffered']
    #allocation3 [shape = 's32[1]{0}', space=sflag, size = 0x4, scoped, tag = 'scoped memory for net_forward.1']
    %7 = vsyncpa [#allocation3], 0
    // Predicated region
    $region2: #{net_forward.1} parent=1 // pred_check
      _
    $region3: #{net_forward.1} parent=1 // pred_check_branch
      %9 = sbr.rel (0) target = $region5
    $region4: #{net_forward.1} parent=1 // pred_region
      %s11 = ssub.s32 16, 16
      %12 = vsyncadd [#allocation3], %s11
      %s14 = sshll.u32 %s0, 4
      %s15 = int_to_ptr.vmem [resolvable:$true] %s14
      %17 = dma.vmem_to_smem %s15, 16, [#allocation2], [#allocation3]
    $region5: #{net_forward.1} parent=1 // pred_fallthru
      _
    // Predicated region
    $region6: #{net_forward.1} parent=1 // pred_check
      _
    $region7: #{net_forward.1} parent=1 // pred_check_branch
      %19 = sbr.rel (0) target = $region9
    $region8: #{net_forward.1} parent=1 // pred_region
      _
    $region9: #{net_forward.1} parent=1 // pred_fallthru
      _
    // Predicated region
    $region10: #{net_forward.1} parent=1 // pred_check
      _
    $region11: #{net_forward.1} parent=1 // pred_check_branch
      %21 = sbr.rel (0) target = $region13
    $region12: #{net_forward.1} parent=1 // pred_region
      %22 = dma.done [#allocation3], 16
    $region13: #{net_forward.1} parent=1 // pred_fallthru
      _
    %23 = sfence
    %v24 = vld [vmem:[%s1] sm:$0x1]
    %s25 = scalar_lea.vmem %s1, 1
    %v26 = vld [vmem:[%s25] sm:$0x1]
    %s27 = scalar_lea.vmem %s1, 2
    %v28 = vld [vmem:[%s27] sm:$0x1]
    %s29 = scalar_lea.vmem %s1, 3
    %v30 = vld [vmem:[%s29] sm:$0x1]
    %s31 = sld [smem:[#allocation2]]
    %v32 = vstv %s31
    %v33 = vmul.f32 %v24, %v32
    %s34 = sld [smem:[#allocation2 + $0x1]]
    %v35 = vstv %s34
    %v36 = vmul.f32 %v26, %v35
    %v37 = vadd.f32 %v33, %v36
    %s38 = sld [smem:[#allocation2 + $0x2]]
    %v39 = vstv %s38
    %v40 = vmul.f32 %v28, %v39
    %v41 = vadd.f32 %v37, %v40
    %s42 = sld [smem:[#allocation2 + $0x3]]
    %v43 = vstv %s42
    %v44 = vmul.f32 %v30, %v43
    %v45 = vadd.f32 %v41, %v44
    %s46 = sld [smem:[#allocation2 + $0x10]]
    %v47 = vstv %s46
    %v48 = vadd.f32 %v45, %v47
    %v49 = vmax.f32 %v48, 0.0
    %s50 = sld [smem:[#allocation2 + $0x4]]
    %v51 = vstv %s50
    %v52 = vmul.f32 %v24, %v51
    %s53 = sld [smem:[#allocation2 + $0x5]]
    %v54 = vstv %s53
    %v55 = vmul.f32 %v26, %v54
    %v56 = vadd.f32 %v52, %v55
    %s57 = sld [smem:[#allocation2 + $0x6]]
    %v58 = vstv %s57
    %v59 = vmul.f32 %v28, %v58
    %v60 = vadd.f32 %v56, %v59
    %s61 = sld [smem:[#allocation2 + $0x7]]
    %v62 = vstv %s61
    %v63 = vmul.f32 %v30, %v62
    %v64 = vadd.f32 %v60, %v63
    %s65 = sld [smem:[#allocation2 + $0x11]]
    %v66 = vstv %s65
    %v67 = vadd.f32 %v64, %v66
    %v68 = vmax.f32 %v67, 0.0
    %s69 = sld [smem:[#allocation2 + $0x8]]
    %v70 = vstv %s69
    %v71 = vmul.f32 %v24, %v70
    %s72 = sld [smem:[#allocation2 + $0x9]]
    %v73 = vstv %s72
    %v74 = vmul.f32 %v26, %v73
    %v75 = vadd.f32 %v71, %v74
    %s76 = sld [smem:[#allocation2 + $0xa]]
    %v77 = vstv %s76
    %v78 = vmul.f32 %v28, %v77
    %v79 = vadd.f32 %v75, %v78
    %s80 = sld [smem:[#allocation2 + $0xb]]
    %v81 = vstv %s80
    %v82 = vmul.f32 %v30, %v81
    %v83 = vadd.f32 %v79, %v82
    %s84 = sld [smem:[#allocation2 + $0x12]]
    %v85 = vstv %s84
    %v86 = vadd.f32 %v83, %v85
    %v87 = vmax.f32 %v86, 0.0
    %s88 = sld [smem:[#allocation2 + $0xc]]
    %v89 = vstv %s88
    %v90 = vmul.f32 %v24, %v89
    %s91 = sld [smem:[#allocation2 + $0xd]]
    %v92 = vstv %s91
    %v93 = vmul.f32 %v26, %v92
    %v94 = vadd.f32 %v90, %v93
    %s95 = sld [smem:[#allocation2 + $0xe]]
    %v96 = vstv %s95
    %v97 = vmul.f32 %v28, %v96
    %v98 = vadd.f32 %v94, %v97
    %s99 = sld [smem:[#allocation2 + $0xf]]
    %v100 = vstv %s99
    %v101 = vmul.f32 %v30, %v100
    %v102 = vadd.f32 %v98, %v101
    %s103 = sld [smem:[#allocation2 + $0x13]]
    %v104 = vstv %s103
    %v105 = vadd.f32 %v102, %v104
    %v106 = vmax.f32 %v105, 0.0
    %s107 = sld [smem:[#allocation2 + $0x14]]
    %v108 = vstv %s107
    %v109 = vmul.f32 %v49, %v108
    %s110 = sld [smem:[#allocation2 + $0x15]]
    %v111 = vstv %s110
    %v112 = vmul.f32 %v68, %v111
    %v113 = vadd.f32 %v109, %v112
    %s114 = sld [smem:[#allocation2 + $0x16]]
    %v115 = vstv %s114
    %v116 = vmul.f32 %v87, %v115
    %v117 = vadd.f32 %v113, %v116
    %s118 = sld [smem:[#allocation2 + $0x17]]
    %v119 = vstv %s118
    %v120 = vmul.f32 %v106, %v119
    %v121 = vadd.f32 %v117, %v120
    %s122 = sld [smem:[#allocation2 + $0x20]]
    %v123 = vstv %s122
    %v124 = vadd.f32 %v121, %v123
    %125 = vst [vmem:[%s2] sm:$0x1] %v124
    %s126 = sld [smem:[#allocation2 + $0x18]]
    %v127 = vstv %s126
    %v128 = vmul.f32 %v49, %v127
    %s129 = sld [smem:[#allocation2 + $0x19]]
    %v130 = vstv %s129
    %v131 = vmul.f32 %v68, %v130
    %v132 = vadd.f32 %v128, %v131
    %s133 = sld [smem:[#allocation2 + $0x1a]]
    %v134 = vstv %s133
    %v135 = vmul.f32 %v87, %v134
    %v136 = vadd.f32 %v132, %v135
    %s137 = sld [smem:[#allocation2 + $0x1b]]
    %v138 = vstv %s137
    %v139 = vmul.f32 %v106, %v138
    %v140 = vadd.f32 %v136, %v139
    %s141 = sld [smem:[#allocation2 + $0x21]]
    %v142 = vstv %s141
    %v143 = vadd.f32 %v140, %v142
    %s144 = scalar_lea.vmem %s2, 1
    %145 = vst [vmem:[%s144] sm:$0x1] %v143
    %s146 = sld [smem:[#allocation2 + $0x1c]]
    %v147 = vstv %s146
    %v148 = vmul.f32 %v49, %v147
    %s149 = sld [smem:[#allocation2 + $0x1d]]
    %v150 = vstv %s149
    %v151 = vmul.f32 %v68, %v150
    %v152 = vadd.f32 %v148, %v151
    %s153 = sld [smem:[#allocation2 + $0x1e]]
    %v154 = vstv %s153
    %v155 = vmul.f32 %v87, %v154
    %v156 = vadd.f32 %v152, %v155
    %s157 = sld [smem:[#allocation2 + $0x1f]]
    %v158 = vstv %s157
    %v159 = vmul.f32 %v106, %v158
    %v160 = vadd.f32 %v156, %v159
    %s161 = sld [smem:[#allocation2 + $0x22]]
    %v162 = vstv %s161
    %v163 = vadd.f32 %v160, %v162
    %s164 = scalar_lea.vmem %s2, 2
    %165 = vst [vmem:[%s164] sm:$0x1] %v163
    // Predicated region
    $region14: #{net_forward.1} parent=1 // pred_check
      _
    $region15: #{net_forward.1} parent=1 // pred_check_branch
      %167 = sbr.rel (0) target = $region17
    $region16: #{net_forward.1} parent=1 // pred_region
      _
    $region17: #{net_forward.1} parent=1 // pred_fallthru
      _
    // Predicated region
    $region18: #{net_forward.1} parent=1 // pred_check
      _
    $region19: #{net_forward.1} parent=1 // pred_check_branch
      %169 = sbr.rel (0) target = $region21
    $region20: #{net_forward.1} parent=1 // pred_region
      _
    $region21: #{net_forward.1} parent=1 // pred_fallthru
      _
    %170 = vsyncpa [#allocation3], 1

</llo_original>
